<compile_context>
chip_gen: v7x
topology: tpu7x:2x2x1
jax: 0.10.0
libtpu: 0.0.40
codegen_flags: <defaults>
</compile_context>

<pallas_src>
import jax
import jax.numpy as jnp
from jax.experimental import pallas as pl
from jax.experimental.pallas import tpu as pltpu


# --------------------------------------------------------------------------- #
# Kernel
# --------------------------------------------------------------------------- #
def _merge_weight_kernel(x_ref, w_ref, b_ref, o_ref):
    # x_ref: (TB, D)  — batch tile of the pre-concatenated input (D = D1 + D2)
    # w_ref: (D, O)   — pre-transposed Linear weight (grid-invariant, VMEM)
    # b_ref: (1, O)   — bias (grid-invariant, VMEM)
    # o_ref: (TB, O)  — row-wise softmax output
    logits = jnp.dot(x_ref[...], w_ref[...], preferred_element_type=jnp.float32)
    logits = logits + b_ref[...].astype(jnp.float32)

    # Numerically-stable softmax along the last dim (torch dim=1), in f32.
    # NOTE: when B is not a multiple of TB the last block's padded rows hold
    # stale values; softmax is row-wise and the output store is masked to the
    # valid region, so valid rows are unaffected — do NOT add a mask here.
    m = jnp.max(logits, axis=-1, keepdims=True)
    e = jnp.exp(logits - m)
    denom = jnp.sum(e, axis=-1, keepdims=True)
    # Exact (TB, 1) divide: essentially free (EUP exp is the real vector cost)
    # and keeps row sums == 1 to full f32 precision.
    o_ref[...] = (e * (1.0 / denom)).astype(o_ref.dtype)


# --------------------------------------------------------------------------- #
# One-time parameter prep (hoisted out of the hot path)
# --------------------------------------------------------------------------- #
def prepare_merge_weight_params(weight, bias, dtype=jnp.float32):
    """weight: (O, D1+D2) as in nn.Linear; bias: (O,).

    Returns (w_t, b2) with w_t: (D1+D2, O), b2: (1, O).
    Pass dtype=jnp.bfloat16 to halve HBM traffic for the streamed weight/x
    (matmul still accumulates in f32; softmax stays f32)."""
    w_t = jnp.asarray(weight, dtype=dtype).T           # (D, O)
    b2 = jnp.asarray(bias, dtype=jnp.float32).reshape(1, -1)
    return w_t, b2


# --------------------------------------------------------------------------- #
# Tiling / VMEM model
# --------------------------------------------------------------------------- #
def _round_up(x, m):
    return ((x + m - 1) // m) * m


def _padded_tile_bytes(rows, cols, itemsize):
    # VMEM tiles pad the sublane dim to 8 and the lane dim to 128.
    return _round_up(max(rows, 1), 8) * _round_up(max(cols, 1), 128) * itemsize


def _vmem_capacity_bytes():
    try:
        return int(pltpu.get_tpu_info().vmem_capacity_bytes)
    except Exception:
        return 64 << 20  # conservative fallback (v7x per-TC capacity)


def _working_set_bytes(tb, d, o, x_isz, w_isz, out_isz):
    # Streamed x / out tiles are double-buffered by the Pallas pipeline.
    stream = (2 * _padded_tile_bytes(tb, d, x_isz)
              + 2 * _padded_tile_bytes(tb, o, out_isz))
    # Grid-invariant W / bias: counted double-buffered too (conservative; the
    # constant index_map means Mosaic only DMAs them once either way).
    resident = 2 * (_padded_tile_bytes(d, o, w_isz)
                    + _padded_tile_bytes(1, o, 4))
    return stream + resident


def _choose_tb(batch, d, o, x_isz, w_isz, out_isz, vmem_budget):
    """Batch tile: >= 2 grid steps (target ~4) so the 'parallel' axis shards
    across v7x's two TCs and DMAs pipeline; multiple of 8; capped at 512
    (measured ~85% of HBM roofline); shrunk to fit the padded VMEM budget."""
    target_steps = 4
    tb = _round_up(pl.cdiv(batch, target_steps), 8)
    tb = max(8, min(tb, 512, _round_up(batch, 8)))
    while tb > 8:
        if _working_set_bytes(tb, d, o, x_isz, w_isz, out_isz) + (2 << 20) \
                <= vmem_budget:
            break
        tb = _round_up(tb // 2, 8)
    return tb


# --------------------------------------------------------------------------- #
# Forward
# --------------------------------------------------------------------------- #
def merge_weight_forward(x1, x2, w_t, b2, *, min_pallas_batch=64):
    """x1: (B, D1), x2: (B, D2); (w_t, b2) from prepare_merge_weight_params."""
    B = x1.shape[0]
    D = x1.shape[1] + x2.shape[1]
    O = w_t.shape[1]

    # Fuse the concat once in HBM (single cheap XLA op): the kernel then
    # streams one lane-dense (TB, D) tile and does ONE matmul with K = D1+D2.
    x = jnp.concatenate([x1, x2], axis=1).astype(w_t.dtype)

    # Tiny batches: fixed pallas_call + per-step overhead dominates — let XLA
    # fuse softmax(x @ W + b) directly.
    if B < min_pallas_batch:
        logits = jnp.dot(x, w_t, preferred_element_type=jnp.float32) + b2
        return jax.nn.softmax(logits, axis=1)

    vmem_cap = _vmem_capacity_bytes()
    vmem_budget = int(vmem_cap * 0.75)       # headroom for Mosaic internals

    x_isz = jnp.dtype(x.dtype).itemsize
    w_isz = jnp.dtype(w_t.dtype).itemsize
    out_isz = 4                              # f32 output

    tb = _choose_tb(B, D, O, x_isz, w_isz, out_isz, vmem_budget)
    grid = (pl.cdiv(B, tb),)

    ws = _working_set_bytes(tb, D, O, x_isz, w_isz, out_isz)
    vmem_limit = int(min(max(ws + (4 << 20), 16 << 20), vmem_cap))

    return pl.pallas_call(
        _merge_weight_kernel,
        out_shape=jax.ShapeDtypeStruct((B, O), jnp.float32),
        grid_spec=pltpu.PrefetchScalarGridSpec(
            num_scalar_prefetch=0,
            grid=grid,
            in_specs=[
                pl.BlockSpec((tb, D), lambda i: (i, 0)),   # streamed x tile
                pl.BlockSpec((D, O), lambda i: (0, 0)),    # W  (grid-invariant)
                pl.BlockSpec((1, O), lambda i: (0, 0)),    # b  (grid-invariant)
            ],
            out_specs=pl.BlockSpec((tb, O), lambda i: (i, 0)),
        ),
        compiler_params=pltpu.CompilerParams(
            dimension_semantics=("parallel",),
            vmem_limit_bytes=vmem_limit,
        ),
    )(x, w_t, b2)


# --------------------------------------------------------------------------- #
# Demo / correctness check
# --------------------------------------------------------------------------- #
if __name__ == "__main__":
    # Small shapes consistent with the module: x1 (B, D1), x2 (B, D2),
    # input_dim = D1 + D2 (lane-dense 128), output_dim = O.  B large enough to
    # exercise the tiled Pallas path (4 grid steps at TB = 64).
    B, D1, D2, O = 256, 64, 64, 128
    input_dim = D1 + D2

    key = jax.random.PRNGKey(0)
    k1, k2, kw, kb = jax.random.split(key, 4)

    x1 = jax.random.normal(k1, (B, D1), dtype=jnp.float32)
    x2 = jax.random.normal(k2, (B, D2), dtype=jnp.float32)

    # Parameter init matching nn.Linear's uniform(-1/sqrt(in), 1/sqrt(in)).
    bound = 1.0 / (input_dim ** 0.5)
    weight = jax.random.uniform(kw, (O, input_dim), minval=-bound, maxval=bound,
                                dtype=jnp.float32)
    bias = jax.random.uniform(kb, (O,), minval=-bound, maxval=bound,
                              dtype=jnp.float32)

    # One-time param prep (outside the hot path).  f32 here for tight parity;
    # pass dtype=jnp.bfloat16 in production to halve HBM traffic.
    w_t, b2 = prepare_merge_weight_params(weight, bias)

    out = merge_weight_forward(x1, x2, w_t, b2)
    jax.block_until_ready(out)

    # Reference: original module semantics.
    ref = jax.nn.softmax(jnp.concatenate([x1, x2], axis=1) @ weight.T + bias,
                         axis=1)
    assert out.shape == (B, O)
    assert jnp.allclose(out, ref, atol=1e-5, rtol=1e-5), "mismatch vs reference"
    assert jnp.allclose(jnp.sum(out, axis=1), 1.0, atol=1e-5), "rows not normalized"

    print("KERNEL_OK")
</pallas_src>

<mosaic_0001>
module attributes {stable_mosaic.version = 11 : i64} {
  func.func @_merge_weight_kernel(%arg0: i32, %arg1: memref<64x128xf32, #tpu.memory_space<vmem>>, %arg2: memref<128x128xf32, #tpu.memory_space<vmem>>, %arg3: memref<1x128xf32, #tpu.memory_space<vmem>>, %arg4: memref<64x128xf32, #tpu.memory_space<vmem>>) attributes {dimension_semantics = [#tpu.dimension_semantics<parallel>], iteration_bounds = array<i64: 4>, scalar_prefetch = 0 : i64, scratch_operands = 0 : i64, tpu.core_type = #tpu.core_type<tc>, window_params = [{transform_indices = @transform_0, window_bounds = array<i64: 64, 128>}, {pipeline_mode = #tpu.pipeline_mode<synchronous>, transform_indices = @transform_1, window_bounds = array<i64: 128, 128>}, {pipeline_mode = #tpu.pipeline_mode<synchronous>, transform_indices = @transform_2, window_bounds = array<i64: 1, 128>}, {transform_indices = @transform_3, window_bounds = array<i64: 64, 128>}]} {
    %c0 = arith.constant 0 : index
    %c0_0 = arith.constant 0 : index
    %0 = vector.load %arg1[%c0, %c0_0] : memref<64x128xf32, #tpu.memory_space<vmem>>, vector<64x128xf32>
    %c0_1 = arith.constant 0 : index
    %c0_2 = arith.constant 0 : index
    %1 = vector.load %arg2[%c0_1, %c0_2] : memref<128x128xf32, #tpu.memory_space<vmem>>, vector<128x128xf32>
    %cst = arith.constant dense<0.000000e+00> : vector<64x128xf32>
    %2 = tpu.matmul %0, %1, %cst {dimension_numbers = #tpu.dot_dimension_numbers<[1], [0], [0], [1], [0, 0, 1, 1], [], []>} : vector<64x128xf32>, vector<128x128xf32>, vector<64x128xf32> -> vector<64x128xf32>
    %c0_3 = arith.constant 0 : index
    %c0_4 = arith.constant 0 : index
    %3 = vector.load %arg3[%c0_3, %c0_4] : memref<1x128xf32, #tpu.memory_space<vmem>>, vector<1x128xf32>
    %4 = vector.broadcast %3 : vector<1x128xf32> to vector<64x128xf32>
    %5 = arith.addf %2, %4 : vector<64x128xf32>
    %cst_5 = arith.constant dense<0xFF800000> : vector<64xf32>
    %6 = vector.multi_reduction <maximumf>, %5, %cst_5 [1] : vector<64x128xf32> to vector<64xf32>
    %7 = vector.shape_cast %6 : vector<64xf32> to vector<64x1xf32>
    %8 = vector.broadcast %7 : vector<64x1xf32> to vector<64x128xf32>
    %9 = arith.subf %5, %8 : vector<64x128xf32>
    %10 = math.exp %9 : vector<64x128xf32>
    %cst_6 = arith.constant dense<0.000000e+00> : vector<64xf32>
    %11 = vector.multi_reduction <add>, %10, %cst_6 [1] : vector<64x128xf32> to vector<64xf32>
    %12 = vector.shape_cast %11 : vector<64xf32> to vector<64x1xf32>
    %cst_7 = arith.constant 1.000000e+00 : f32
    %13 = vector.broadcast %cst_7 : f32 to vector<64x1xf32>
    %14 = arith.divf %13, %12 : vector<64x1xf32>
    %15 = vector.broadcast %14 : vector<64x1xf32> to vector<64x128xf32>
    %16 = arith.mulf %10, %15 : vector<64x128xf32>
    %c0_8 = arith.constant 0 : index
    %c0_9 = arith.constant 0 : index
    %17 = vector.load %arg4[%c0_8, %c0_9] : memref<64x128xf32, #tpu.memory_space<vmem>>, vector<64x128xf32>
    tpu.vector_store %arg4[%c0_8, %c0_9], %16 {strides = array<i32>} : memref<64x128xf32, #tpu.memory_space<vmem>>, vector<64x128xf32>,
    return
  }
  func.func @transform_0(%arg0: i32) -> (i32, i32) {
    %c0_i32 = arith.constant 0 : i32
    %c0_i32_0 = arith.constant 0 : i32
    return %arg0, %c0_i32 : i32, i32
  }
  func.func @transform_1(%arg0: i32) -> (i32, i32) {
    %c0_i32 = arith.constant 0 : i32
    %c0_i32_0 = arith.constant 0 : i32
    %c0_i32_1 = arith.constant 0 : i32
    return %c0_i32, %c0_i32_0 : i32, i32
  }
  func.func @transform_2(%arg0: i32) -> (i32, i32) {
    %c0_i32 = arith.constant 0 : i32
    %c0_i32_0 = arith.constant 0 : i32
    %c0_i32_1 = arith.constant 0 : i32
    return %c0_i32, %c0_i32_0 : i32, i32
  }
  func.func @transform_3(%arg0: i32) -> (i32, i32) {
    %c0_i32 = arith.constant 0 : i32
    %c0_i32_0 = arith.constant 0 : i32
    return %arg0, %c0_i32 : i32, i32
  }
}

</mosaic_0001>

<llo_original>
// kernel: tpu_custom_call.1
$region0: #{tpu_custom_call.1}
  #allocation0 [shape = 'u32[]', space=smem, size = 0x4, offset = 0x4, fixed_abs, tag = 'smem constant byte address 0x4 - core index']
  #allocation1 [shape = 'u32[144,128]{1,0:T(1,128)}', space=vmem, size = 0x12000, scoped, tag = 'internal scratch']
  %s0 = inlined_call_operand.hbm [shape: f32[256,128], index: 0, kind: input, shape index: {}]
  %s1 = inlined_call_operand.hbm [shape: f32[128,128], index: 1, kind: input, shape index: {}]
  %s2 = inlined_call_operand.vmem [shape: f32[1,128], index: 2, kind: input, shape index: {}]
  %s3 = inlined_call_operand.hbm [shape: f32[256,128], index: 3, kind: output, shape index: {}]
  %s4 = sld [smem:[#allocation0]]
  $region53: #{tpu_custom_call.1} parent=0
    _
  %s6 = ssub.s32 1, %s4
  %s7 = scalar_select 0, %s6, %s4
  $region1: #{tpu_custom_call.1} parent=0
    #allocation2 [shape = 'u8[65536]{0}', space=vmem, size = 0x10000, scoped, tag = 'input window, operand 0']
    #allocation3 [shape = 's32[2]{0}', space=sflag, size = 0x8, scoped, tag = 'scoped memory for tpu_custom_call.1']
    #allocation4 [shape = 's32[2]{0}', space=sflag, size = 0x8, scoped, tag = 'scoped memory for tpu_custom_call.1']
    #allocation5 [shape = 'u8[65536]{0}', space=vmem, size = 0x10000, scoped, tag = 'input window, operand 1, single buffered']
    #allocation6 [shape = 's32[1]{0}', space=sflag, size = 0x4, scoped, tag = 'scoped memory for tpu_custom_call.1']
    #allocation7 [shape = 'u8[65536]{0}', space=vmem, size = 0x10000, scoped, tag = 'output window, operand 0']
    %8 = vsyncpa [#allocation3], 0
    %s9 = scalar_lea.sflag [#allocation3], 1
    %10 = vsyncpa %s9, 0
    %11 = vsyncpa [#allocation6], 0
    %12 = vsyncpa [#allocation4], 0
    %s13 = scalar_lea.sflag [#allocation4], 1
    %14 = vsyncpa %s13, 0
    loop: start=0, step=1, limit=6
    $region2: #{tpu_custom_call.1} parent=1 // loop_pre_header
      _
    $region3: #{tpu_custom_call.1} parent=1 // loop_header
      %s16 = sphi 0, %s20
      %p17 = scmp.ge.s32.totalorder %s16, 6
      %s26 = sphi 0, %s28
      %s29 = sphi 0, %s26
      %s30 = sphi 0, %s29
      %s46 = sphi 0, %s30
      %s50 = sphi 0, %s50
      %s52 = sphi 0, %s50
      %s53 = sphi 0, %s52
      %s67 = sphi 0, %s53
      %s71 = sphi 0, %s71
      %s73 = sphi 0, %s71
      %s74 = sphi 0, %s73
      %s88 = sphi 0, %s74
      %s94 = sphi 0, %s96
      %s97 = sphi 0, %s94
      %s98 = sphi 0, %s97
      %s114 = sphi 0, %s98
    $region4: #{tpu_custom_call.1} parent=1 // loop_header_branch
      %19 = sbr.rel (%p17) target = $region8
    $region5: #{tpu_custom_call.1} parent=1 // loop_body
      %s21 = ssub.s32 %s16, 1
      %s22 = ssub.s32 %s16, 2
      %s23 = sadd.s32 %s16, 1
      %s24 = ssub.s32 %s16, %s23
      %p25 = scmp.eq.s32.totalorder %s24, 0
      %s27 = sadd.s32 %s26, 1
      %s28 = scalar_select %p25, %s26, %s27
      %p31 = pneg %p25
      %p32 = scmp.eq.s32.totalorder %s16, 3
      %p33 = por %p31, %p32
      %p34 = scmp.ne.s32.totalorder %s26, %s29
      %p35 = scmp.eq.s32.totalorder %s16, 0
      %p36 = por %p34, %p35
      %p37 = scmp.ne.s32.totalorder %s26, %s29
      %p38 = scmp.eq.s32.totalorder %s21, 3
      %p39 = por %p37, %p38
      %p40 = scmp.ne.s32.totalorder %s29, %s30
      %p41 = scmp.eq.s32.totalorder %s21, 0
      %p42 = por %p40, %p41
      %p43 = scmp.ne.s32.totalorder %s29, %s30
      %p44 = scmp.eq.s32.totalorder %s22, 3
      %p45 = por %p43, %p44
      %p47 = scmp.ne.s32.totalorder %s30, %s46
      %p48 = scmp.eq.s32.totalorder %s22, 0
      %p49 = por %p47, %p48
      %s51 = sadd.s32 %s50, 1
      %p54 = scmp.eq.s32.totalorder %s16, 3
      %p55 = scmp.ne.s32.totalorder %s50, %s52
      %p56 = scmp.eq.s32.totalorder %s16, 0
      %p57 = por %p55, %p56
      %p58 = scmp.ne.s32.totalorder %s50, %s52
      %p59 = scmp.eq.s32.totalorder %s21, 3
      %p60 = por %p58, %p59
      %p61 = scmp.ne.s32.totalorder %s52, %s53
      %p62 = scmp.eq.s32.totalorder %s21, 0
      %p63 = por %p61, %p62
      %p64 = scmp.ne.s32.totalorder %s52, %s53
      %p65 = scmp.eq.s32.totalorder %s22, 3
      %p66 = por %p64, %p65
      %p68 = scmp.ne.s32.totalorder %s53, %s67
      %p69 = scmp.eq.s32.totalorder %s22, 0
      %p70 = por %p68, %p69
      %s72 = sadd.s32 %s71, 1
      %p75 = scmp.eq.s32.totalorder %s16, 3
      %p76 = scmp.ne.s32.totalorder %s71, %s73
      %p77 = scmp.eq.s32.totalorder %s16, 0
      %p78 = por %p76, %p77
      %p79 = scmp.ne.s32.totalorder %s71, %s73
      %p80 = scmp.eq.s32.totalorder %s21, 3
      %p81 = por %p79, %p80
      %p82 = scmp.ne.s32.totalorder %s73, %s74
      %p83 = scmp.eq.s32.totalorder %s21, 0
      %p84 = por %p82, %p83
      %p85 = scmp.ne.s32.totalorder %s73, %s74
      %p86 = scmp.eq.s32.totalorder %s22, 3
      %p87 = por %p85, %p86
      %p89 = scmp.ne.s32.totalorder %s74, %s88
      %p90 = scmp.eq.s32.totalorder %s22, 0
      %p91 = por %p89, %p90
      %s92 = ssub.s32 %s16, %s23
      %p93 = scmp.eq.s32.totalorder %s92, 0
      %s95 = sadd.s32 %s94, 1
      %s96 = scalar_select %p93, %s94, %s95
      %p99 = pneg %p93
      %p100 = scmp.eq.s32.totalorder %s16, 3
      %p101 = por %p99, %p100
      %p102 = scmp.ne.s32.totalorder %s94, %s97
      %p103 = scmp.eq.s32.totalorder %s16, 0
      %p104 = por %p102, %p103
      %p105 = scmp.ne.s32.totalorder %s94, %s97
      %p106 = scmp.eq.s32.totalorder %s21, 3
      %p107 = por %p105, %p106
      %p108 = scmp.ne.s32.totalorder %s97, %s98
      %p109 = scmp.eq.s32.totalorder %s21, 0
      %p110 = por %p108, %p109
      %p111 = scmp.ne.s32.totalorder %s97, %s98
      %p112 = scmp.eq.s32.totalorder %s22, 3
      %p113 = por %p111, %p112
      %p115 = scmp.ne.s32.totalorder %s98, %s114
      %p116 = scmp.eq.s32.totalorder %s22, 0
      %p117 = por %p115, %p116
      %p118 = scmp.le.s32.totalorder 1, %s16
      %p119 = scmp.lt.s32.totalorder %s16, 5
      %p120 = pnand %p118, %p119
      %p121 = pneg %p120
      // Predicated region
      $region9: #{tpu_custom_call.1} parent=5 // pred_check
        _
      $region10: #{tpu_custom_call.1} parent=5 // pred_check_branch
        %123 = sbr.rel (%p120) target = $region12
      $region11: #{tpu_custom_call.1} parent=5 // pred_region
        %s124 = ssub.s32 %s16, 1
        // Predicated region
        $region13: #{tpu_custom_call.1} parent=11 // pred_check
          %p125 = pneg %p63
        $region14: #{tpu_custom_call.1} parent=11 // pred_check_branch
          %127 = sbr.rel (%p125) target = $region16
        $region15: #{tpu_custom_call.1} parent=11 // pred_region
          %s129 = ssub.s32 2048, 2048
          %130 = vsyncadd [#allocation6], %s129
          %s131 = sshll.u32 [#allocation5], 4
          %s132 = int_to_ptr.vmem [resolvable:$true] %s131
          %137 = dma.hbm_to_vmem [thread:$0]  %s1, 2048, %s132, [#allocation6], 128, 128, 8
        $region16: #{tpu_custom_call.1} parent=11 // pred_fallthru
          _
        // Predicated region
        $region17: #{tpu_custom_call.1} parent=11 // pred_check
          %p138 = pneg %p84
        $region18: #{tpu_custom_call.1} parent=11 // pred_check_branch
          %140 = sbr.rel (%p138) target = $region20
        $region19: #{tpu_custom_call.1} parent=11 // pred_region
          _
        $region20: #{tpu_custom_call.1} parent=11 // pred_fallthru
          _
      $region12: #{tpu_custom_call.1} parent=5 // pred_fallthru
        _
      %p141 = scmp.lt.s32.totalorder %s16, 4
      // Predicated region
      $region21: #{tpu_custom_call.1} parent=5 // pred_check
        %p142 = pneg %p141
      $region22: #{tpu_custom_call.1} parent=5 // pred_check_branch
        %144 = sbr.rel (%p142) target = $region24
      $region23: #{tpu_custom_call.1} parent=5 // pred_region
        // Predicated region
        $region25: #{tpu_custom_call.1} parent=23 // pred_check
          %p145 = pneg %p36
        $region26: #{tpu_custom_call.1} parent=23 // pred_check_branch
          %147 = sbr.rel (%p145) target = $region28
        $region27: #{tpu_custom_call.1} parent=23 // pred_region
          %s148 = sand.u32 %s26, 1
          %s149 = scalar_lea.sflag [#allocation3], %s148
          %s150 = sand.u32 %s26, 1
          %s151 = smul.addr %s150, 64
          %s152 = scalar_lea.vmem [#allocation2], %s151
          %s153 = smul.u32 8, %s16
          %s155 = ssub.s32 1024, 1024
          %156 = vsyncadd %s149, %s155
          %s157 = smul.addr %s153, 128
          %s158 = scalar_lea.hbm %s0, %s157
          %s159 = sshll.u32 %s152, 4
          %s160 = int_to_ptr.vmem [resolvable:$true] %s159
          %165 = dma.hbm_to_vmem [thread:$0]  %s158, 1024, %s160, %s149, 128, 128, 8
        $region28: #{tpu_custom_call.1} parent=23 // pred_fallthru
          _
      $region24: #{tpu_custom_call.1} parent=5 // pred_fallthru
        _
      %p166 = scmp.le.s32.totalorder 1, %s16
      %p167 = scmp.lt.s32.totalorder %s16, 5
      %p168 = pnand %p166, %p167
      %p169 = pneg %p168
      // Predicated region
      $region29: #{tpu_custom_call.1} parent=5 // pred_check
        _
      $region30: #{tpu_custom_call.1} parent=5 // pred_check_branch
        %171 = sbr.rel (%p168) target = $region32
      $region31: #{tpu_custom_call.1} parent=5 // pred_region
        %s172 = ssub.s32 %s16, 1
        %s173 = sand.u32 %s29, 1
        %s174 = scalar_lea.sflag [#allocation3], %s173
        %s175 = sand.u32 %s29, 1
        %s176 = smul.addr %s175, 64
        %s177 = scalar_lea.vmem [#allocation2], %s176
        // Predicated region
        $region33: #{tpu_custom_call.1} parent=31 // pred_check
          %p178 = pneg %p42
        $region34: #{tpu_custom_call.1} parent=31 // pred_check_branch
          %180 = sbr.rel (%p178) target = $region36
        $region35: #{tpu_custom_call.1} parent=31 // pred_region
          %181 = dma.done %s174, 1024
        $region36: #{tpu_custom_call.1} parent=31 // pred_fallthru
          _
        // Predicated region
        $region37: #{tpu_custom_call.1} parent=31 // pred_check
          %p182 = pneg %p63
        $region38: #{tpu_custom_call.1} parent=31 // pred_check_branch
          %184 = sbr.rel (%p182) target = $region40
        $region39: #{tpu_custom_call.1} parent=31 // pred_region
          %185 = dma.done [#allocation6], 2048
        $region40: #{tpu_custom_call.1} parent=31 // pred_fallthru
          _
        %s186 = sand.u32 %s29, 1
        %s187 = scalar_lea.sflag [#allocation3], %s186
        %s188 = sand.u32 %s29, 1
        %s189 = smul.addr %s188, 64
        %s190 = scalar_lea.vmem [#allocation2], %s189
        %p191 = pneg %p42
        %p192 = pneg %p39
        %p193 = pneg %p63
        %p194 = pneg %p60
        %p195 = pneg %p84
        %p196 = pneg %p81
        %p197 = pneg %p110
        %p198 = pneg %p107
        %s199 = sand.u32 %s97, 1
        %s200 = scalar_lea.sflag [#allocation4], %s199
        %s201 = sand.u32 %s97, 1
        %s202 = smul.addr %s201, 64
        %s203 = scalar_lea.vmem [#allocation7], %s202
        %s204 = smul.u32 8, %s21
        %s205 = smul.u32 8, %s21
        %v206 = vld [vmem:[%s177] sm:$0xff]
        %v207 = vld [vmem:[%s177 + $0x8] sm:$0xff]
        %v208 = vld [vmem:[%s177 + $0x10] sm:$0xff]
        %v209 = vld [vmem:[%s177 + $0x18] sm:$0xff]
        %v210 = vld [vmem:[%s177 + $0x20] sm:$0xff]
        %v211 = vld [vmem:[%s177 + $0x28] sm:$0xff]
        %v212 = vld [vmem:[%s177 + $0x30] sm:$0xff]
        %v213 = vld [vmem:[%s177 + $0x38] sm:$0xff]
        %v214 = vld [vmem:[#allocation5] sm:$0xff]
        %v215 = vld [vmem:[#allocation5 + $0x8] sm:$0xff]
        %v216 = vld [vmem:[#allocation5 + $0x10] sm:$0xff]
        %v217 = vld [vmem:[#allocation5 + $0x18] sm:$0xff]
        %v218 = vld [vmem:[#allocation5 + $0x20] sm:$0xff]
        %v219 = vld [vmem:[#allocation5 + $0x28] sm:$0xff]
        %v220 = vld [vmem:[#allocation5 + $0x30] sm:$0xff]
        %v221 = vld [vmem:[#allocation5 + $0x38] sm:$0xff]
        %v222 = vld [vmem:[#allocation5 + $0x40] sm:$0xff]
        %v223 = vld [vmem:[#allocation5 + $0x48] sm:$0xff]
        %v224 = vld [vmem:[#allocation5 + $0x50] sm:$0xff]
        %v225 = vld [vmem:[#allocation5 + $0x58] sm:$0xff]
        %v226 = vld [vmem:[#allocation5 + $0x60] sm:$0xff]
        %v227 = vld [vmem:[#allocation5 + $0x68] sm:$0xff]
        %v228 = vld [vmem:[#allocation5 + $0x70] sm:$0xff]
        %v229 = vld [vmem:[#allocation5 + $0x78] sm:$0xff]
        %v230 = vld [vmem:[%s2] sm:$0x1]
        %v232 = vlaneseq
        %v233 = vshrl.u32 %v232, 7
        %v234 = vsub.s32 0, %v233
        %v235 = vrot.slane %v230, %v234
        %237 = vmatprep.subr.mxu0 0.0
        %238 = vmatpush1.msra.mxu0 %v214
        %239 = vmatprep.subr.mxu0 0.0
        %240 = vmatpush1.msra.mxu0 %v215
        %241 = vmatprep.subr.mxu0 0.0
        %242 = vmatpush1.msra.mxu0 %v216
        %243 = vmatprep.subr.mxu0 0.0
        %244 = vmatpush1.msra.mxu0 %v217
        %245 = vmatprep.subr.mxu0 0.0
        %246 = vmatpush1.msra.mxu0 %v218
        %247 = vmatprep.subr.mxu0 0.0
        %248 = vmatpush1.msra.mxu0 %v219
        %249 = vmatprep.subr.mxu0 0.0
        %250 = vmatpush1.msra.mxu0 %v220
        %251 = vmatprep.subr.mxu0 0.0
        %252 = vmatpush1.msra.mxu0 %v221
        %253 = vmatprep.subr.mxu0 0.0
        %254 = vmatpush1.msra.mxu0 %v222
        %255 = vmatprep.subr.mxu0 0.0
        %256 = vmatpush1.msra.mxu0 %v223
        %257 = vmatprep.subr.mxu0 0.0
        %258 = vmatpush1.msra.mxu0 %v224
        %259 = vmatprep.subr.mxu0 0.0
        %260 = vmatpush1.msra.mxu0 %v225
        %261 = vmatprep.subr.mxu0 0.0
        %262 = vmatpush1.msra.mxu0 %v226
        %263 = vmatprep.subr.mxu0 0.0
        %264 = vmatpush1.msra.mxu0 %v227
        %265 = vmatprep.subr.mxu0 0.0
        %266 = vmatpush1.msra.mxu0 %v228
        %267 = vmatprep.subr.mxu0 0.0
        %268 = vmatpush1.msra.mxu0 %v229
        %269 = vmatprep.subr.mxu0 0.0
        %270 = vmatpush1.msra.mxu0 0.0
        %271 = vmatprep.subr.mxu0 0.0
        %272 = vmatpush1.msra.mxu0 0.0
        %273 = vmatprep.subr.mxu0 0.0
        %274 = vmatpush1.msra.mxu0 0.0
        %275 = vmatprep.subr.mxu0 0.0
        %276 = vmatpush1.msra.mxu0 0.0
        %277 = vmatprep.subr.mxu0 0.0
        %278 = vmatpush1.msra.mxu0 0.0
        %279 = vmatprep.subr.mxu0 0.0
        %280 = vmatpush1.msra.mxu0 0.0
        %281 = vmatprep.subr.mxu0 0.0
        %282 = vmatpush1.msra.mxu0 0.0
        %283 = vmatprep.subr.mxu0 0.0
        %284 = vmatpush1.msra.mxu0 0.0
        %285 = vmatprep.subr.mxu0 0.0
        %286 = vmatpush1.msra.mxu0 0.0
        %287 = vmatprep.subr.mxu0 0.0
        %288 = vmatpush1.msra.mxu0 0.0
        %289 = vmatprep.subr.mxu0 0.0
        %290 = vmatpush1.msra.mxu0 0.0
        %291 = vmatprep.subr.mxu0 0.0
        %292 = vmatpush1.msra.mxu0 0.0
        %293 = vmatprep.subr.mxu0 0.0
        %294 = vmatpush1.msra.mxu0 0.0
        %295 = vmatprep.subr.mxu0 0.0
        %296 = vmatpush1.msra.mxu0 0.0
        %297 = vmatprep.subr.mxu0 0.0
        %298 = vmatpush1.msra.mxu0 0.0
        %299 = vmatprep.subr.mxu0 0.0
        %300 = vmatpush1.msra.mxu0 0.0
        %301 = vmatprep.mubr.f32.mxu0 0.0
        %302 = vmatmul.mubr.f32.gmra.mrb[0].mxu0 %v206
        %v303 = vpop.f32.mrb[0].mxu0
        %v304 = vadd.f32 %v235, %v303
        %v305 = vpop.f32.mrb[0].mxu0
        %306 = vmatprep.mubr.f32.mxu0 0.0
        %307 = vmatmul.mubr.f32.gmra.mrb[0].mxu0 %v207
        %v308 = vpop.f32.mrb[0].mxu0
        %v309 = vadd.f32 %v235, %v308
        %v310 = vpop.f32.mrb[0].mxu0
        %311 = vmatprep.mubr.f32.mxu0 0.0
        %312 = vmatmul.mubr.f32.gmra.mrb[0].mxu0 %v208
        %v313 = vpop.f32.mrb[0].mxu0
        %v314 = vadd.f32 %v235, %v313
        %v315 = vpop.f32.mrb[0].mxu0
        %316 = vmatprep.mubr.f32.mxu0 0.0
        %317 = vmatmul.mubr.f32.gmra.mrb[0].mxu0 %v209
        %v318 = vpop.f32.mrb[0].mxu0
        %v319 = vadd.f32 %v235, %v318
        %v320 = vpop.f32.mrb[0].mxu0
        %321 = vmatprep.mubr.f32.mxu0 0.0
        %322 = vmatmul.mubr.f32.gmra.mrb[0].mxu0 %v210
        %v323 = vpop.f32.mrb[0].mxu0
        %v324 = vadd.f32 %v235, %v323
        %v325 = vpop.f32.mrb[0].mxu0
        %326 = vmatprep.mubr.f32.mxu0 0.0
        %327 = vmatmul.mubr.f32.gmra.mrb[0].mxu0 %v211
        %v328 = vpop.f32.mrb[0].mxu0
        %v329 = vadd.f32 %v235, %v328
        %v330 = vpop.f32.mrb[0].mxu0
        %331 = vmatprep.mubr.f32.mxu0 0.0
        %332 = vmatmul.mubr.f32.gmra.mrb[0].mxu0 %v212
        %v333 = vpop.f32.mrb[0].mxu0
        %v334 = vadd.f32 %v235, %v333
        %v335 = vpop.f32.mrb[0].mxu0
        %336 = vmatprep.mubr.f32.mxu0 0.0
        %337 = vmatmul.mubr.f32.gmra.mrb[0].mxu0 %v213
        %v338 = vpop.f32.mrb[0].mxu0
        %v339 = vadd.f32 %v235, %v338
        %v340 = vpop.f32.mrb[0].mxu0
        %341 = vdwg.mxu0
        %342 = vmax.xlane.f32.xlu0 %v304
        %v343 = vpop.xlane.xlu0 %342
        %344 = vmax.xlane.f32.xlu0 %v309
        %v345 = vpop.xlane.xlu0 %344
        %346 = vmax.xlane.f32.xlu0 %v314
        %v347 = vpop.xlane.xlu0 %346
        %348 = vmax.xlane.f32.xlu0 %v319
        %v349 = vpop.xlane.xlu0 %348
        %350 = vmax.xlane.f32.xlu0 %v324
        %v351 = vpop.xlane.xlu0 %350
        %352 = vmax.xlane.f32.xlu0 %v329
        %v353 = vpop.xlane.xlu0 %352
        %354 = vmax.xlane.f32.xlu0 %v334
        %v355 = vpop.xlane.xlu0 %354
        %356 = vmax.xlane.f32.xlu0 %v339
        %v357 = vpop.xlane.xlu0 %356
        %v358 = vsub.f32 %v304, %v343
        %v359 = vsub.f32 %v309, %v345
        %v360 = vsub.f32 %v314, %v347
        %v361 = vsub.f32 %v319, %v349
        %v362 = vsub.f32 %v324, %v351
        %v363 = vsub.f32 %v329, %v353
        %v364 = vsub.f32 %v334, %v355
        %v365 = vsub.f32 %v339, %v357
        %v366 = vmul.f32 %v358, 1.442695
        %v367 = vpow.pop %v366
        %v368 = vmul.f32 %v359, 1.442695
        %v369 = vpow.pop %v368
        %v370 = vmul.f32 %v360, 1.442695
        %v371 = vpow.pop %v370
        %v372 = vmul.f32 %v361, 1.442695
        %v373 = vpow.pop %v372
        %v374 = vmul.f32 %v362, 1.442695
        %v375 = vpow.pop %v374
        %v376 = vmul.f32 %v363, 1.442695
        %v377 = vpow.pop %v376
        %v378 = vmul.f32 %v364, 1.442695
        %v379 = vpow.pop %v378
        %v380 = vmul.f32 %v365, 1.442695
        %v381 = vpow.pop %v380
        %382 = vadd.xlane.f32.xlu0 %v367
        %v383 = vpop.xlane.xlu0 %382
        %384 = vadd.xlane.f32.xlu0 %v369
        %v385 = vpop.xlane.xlu0 %384
        %386 = vadd.xlane.f32.xlu0 %v371
        %v387 = vpop.xlane.xlu0 %386
        %388 = vadd.xlane.f32.xlu0 %v373
        %v389 = vpop.xlane.xlu0 %388
        %390 = vadd.xlane.f32.xlu0 %v375
        %v391 = vpop.xlane.xlu0 %390
        %392 = vadd.xlane.f32.xlu0 %v377
        %v393 = vpop.xlane.xlu0 %392
        %394 = vadd.xlane.f32.xlu0 %v379
        %v395 = vpop.xlane.xlu0 %394
        %396 = vadd.xlane.f32.xlu0 %v381
        %v397 = vpop.xlane.xlu0 %396
        %v398 = vrcp.pop %v383
        %v399 = vmul.f32 1.0, %v398
        %v400 = vrcp.pop %v385
        %v401 = vmul.f32 1.0, %v400
        %v402 = vrcp.pop %v387
        %v403 = vmul.f32 1.0, %v402
        %v404 = vrcp.pop %v389
        %v405 = vmul.f32 1.0, %v404
        %v406 = vrcp.pop %v391
        %v407 = vmul.f32 1.0, %v406
        %v408 = vrcp.pop %v393
        %v409 = vmul.f32 1.0, %v408
        %v410 = vrcp.pop %v395
        %v411 = vmul.f32 1.0, %v410
        %v412 = vrcp.pop %v397
        %v413 = vmul.f32 1.0, %v412
        %v414 = vmul.f32 %v367, %v399
        %v415 = vmul.f32 %v369, %v401
        %v416 = vmul.f32 %v371, %v403
        %v417 = vmul.f32 %v373, %v405
        %v418 = vmul.f32 %v375, %v407
        %v419 = vmul.f32 %v377, %v409
        %v420 = vmul.f32 %v379, %v411
        %v421 = vmul.f32 %v381, %v413
        %422 = vst [vmem:[%s203] sm:$0xff] %v414
        %423 = vst [vmem:[%s203 + $0x8] sm:$0xff] %v415
        %424 = vst [vmem:[%s203 + $0x10] sm:$0xff] %v416
        %425 = vst [vmem:[%s203 + $0x18] sm:$0xff] %v417
        %426 = vst [vmem:[%s203 + $0x20] sm:$0xff] %v418
        %427 = vst [vmem:[%s203 + $0x28] sm:$0xff] %v419
        %428 = vst [vmem:[%s203 + $0x30] sm:$0xff] %v420
        %429 = vst [vmem:[%s203 + $0x38] sm:$0xff] %v421
        %s430 = sand.u32 %s97, 1
        %s431 = scalar_lea.sflag [#allocation4], %s430
        %s432 = sand.u32 %s97, 1
        %s433 = smul.addr %s432, 64
        %s434 = scalar_lea.vmem [#allocation7], %s433
        // Predicated region
        $region41: #{tpu_custom_call.1} parent=31 // pred_check
          %p435 = pneg %p107
        $region42: #{tpu_custom_call.1} parent=31 // pred_check_branch
          %437 = sbr.rel (%p435) target = $region44
        $region43: #{tpu_custom_call.1} parent=31 // pred_region
          %s438 = smul.u32 8, %s21
          %s440 = ssub.s32 1024, 1024
          %441 = vsyncadd %s431, %s440
          %s442 = smul.addr %s438, 128
          %s443 = scalar_lea.hbm %s3, %s442
          %s444 = sshll.u32 %s434, 4
          %s445 = int_to_ptr.vmem [resolvable:$true] %s444
          %450 = dma.vmem_to_hbm [thread:$0]  %s445, 1024, %s443, %s431, 128, 128, 8
        $region44: #{tpu_custom_call.1} parent=31 // pred_fallthru
          _
      $region32: #{tpu_custom_call.1} parent=5 // pred_fallthru
        _
      %p451 = scmp.le.s32.totalorder 2, %s16
      // Predicated region
      $region45: #{tpu_custom_call.1} parent=5 // pred_check
        %p452 = pneg %p451
      $region46: #{tpu_custom_call.1} parent=5 // pred_check_branch
        %454 = sbr.rel (%p452) target = $region48
      $region47: #{tpu_custom_call.1} parent=5 // pred_region
        %s455 = ssub.s32 %s16, 2
        // Predicated region
        $region49: #{tpu_custom_call.1} parent=47 // pred_check
          %p456 = pneg %p113
        $region50: #{tpu_custom_call.1} parent=47 // pred_check_branch
          %458 = sbr.rel (%p456) target = $region52
        $region51: #{tpu_custom_call.1} parent=47 // pred_region
          %s459 = sand.u32 %s98, 1
          %s460 = scalar_lea.sflag [#allocation4], %s459
          %s461 = sand.u32 %s98, 1
          %s462 = smul.addr %s461, 64
          %s463 = scalar_lea.vmem [#allocation7], %s462
          %464 = dma.done %s460, 1024
        $region52: #{tpu_custom_call.1} parent=47 // pred_fallthru
          _
      $region48: #{tpu_custom_call.1} parent=5 // pred_fallthru
        _
    $region6: #{tpu_custom_call.1} parent=1 // loop_footer
      %s20 = sadd.s32 1, %s16
    $region7: #{tpu_custom_call.1} parent=1 // loop_footer_branch
      %15 = sbr.rel target = $region3
    $region8: #{tpu_custom_call.1} parent=1 // loop_exit
      _
    %465 = vsyncpa [#allocation3], 1
    %s466 = scalar_lea.sflag [#allocation3], 1
    %467 = vsyncpa %s466, 1
    %468 = vsyncpa [#allocation6], 1
    %469 = vsyncpa [#allocation4], 1
    %s470 = scalar_lea.sflag [#allocation4], 1
    %471 = vsyncpa %s470, 1

</llo_original>
